<compile_context>
chip_gen: v7x
topology: tpu7x:2x2x1
jax: 0.10.0
libtpu: 0.0.40
codegen_flags: <defaults>
</compile_context>

<pallas_src>
import math
from functools import partial

import jax
import jax.numpy as jnp
from jax import lax
from jax.experimental import pallas as pl
from jax.experimental.pallas import tpu as pltpu

_INV_SQRT2 = 1.0 / math.sqrt(2.0)
_SQRT_2_OVER_PI = math.sqrt(2.0 / math.pi)


def _gelu_exact_f32(z):
    # torch.nn.functional.gelu default (approximate='none'): 0.5*z*(1+erf(z/sqrt(2))).
    # NOTE: lax.erf lowers to a VPU polynomial (VALU slot); kept for exact torch parity.
    return 0.5 * z * (1.0 + lax.erf(z * _INV_SQRT2))


def _gelu_tanh_f32(z):
    # approximate='tanh': tanh routes to the EUP slot (co-issues with MXU/VPU), making
    # the activation epilogue nearly free on v6e/v7x.
    return 0.5 * z * (1.0 + jnp.tanh(_SQRT_2_OVER_PI * (z + 0.044715 * z * z * z)))


# ------------------------------- kernels ---------------------------------------------


def _ffn_gelu_kernel_2d(x_ref, w_ref, b_ref, o_ref, *, compute_dtype, act):
    """Fused path: full contraction dim in one tile.  grid = (gn, gm), all parallel."""
    x = x_ref[...].astype(compute_dtype)          # per-tile cast (no wrapper HBM pass)
    z = jnp.dot(x, w_ref[...], preferred_element_type=jnp.float32)
    z = z + b_ref[...].astype(jnp.float32)
    o_ref[...] = act(z).astype(o_ref.dtype)


def _ffn_gelu_kernel_3d(x_ref, w_ref, b_ref, o_ref, acc_ref, *, compute_dtype, act):
    """Split-K path (only when H > 4096 or forced): grid = (gn, gm, gk)."""
    @pl.when(pl.program_id(2) == 0)
    def _():
        acc_ref[...] = jnp.zeros_like(acc_ref)

    x = x_ref[...].astype(compute_dtype)
    acc_ref[...] += jnp.dot(x, w_ref[...], preferred_element_type=jnp.float32)

    @pl.when(pl.program_id(2) == pl.num_programs(2) - 1)
    def _():
        z = acc_ref[...] + b_ref[...].astype(jnp.float32)   # bias last, like torch
        o_ref[...] = act(z).astype(o_ref.dtype)


# ------------------------------- tiling helpers --------------------------------------


def _round_up(x, m):
    return (x + m - 1) // m * m


def _vmem_budget_bytes():
    """Generation-aware scoped-VMEM limit (leave headroom for compiler scratch)."""
    try:
        phys = pltpu.get_tpu_info().vmem_capacity_bytes
    except Exception:
        phys = 64 * 2 ** 20                       # conservative fallback (v7x per-TC)
    # 128 MiB parts (v5e/v6e) -> ~102 MiB; 64 MiB parts (v7x) -> ~48 MiB.
    return int(max(32 * 2 ** 20, min(phys - 16 * 2 ** 20, int(0.8 * phys))))


def _pick_tm(M, target=512):
    """Row tile: multiple of 8; prefer a divisor of M so x never needs padding."""
    if M <= target:
        return _round_up(max(M, 1), 8)
    t = (target // 8) * 8
    while t >= 128:
        if M % t == 0:
            return t
        t -= 8
    return target                                  # fall back: pad M (extra HBM pass)


def _footprint_bytes(tm, tn, tk, x_b, w_b, out_b, split_k):
    """Double-buffered per-step VMEM footprint."""
    f = 2 * tm * tk * x_b + 2 * tk * tn * w_b + 2 * tn * 4 + 2 * tm * tn * out_b
    if split_k:
        f += tm * tn * 4                           # f32 accumulator scratch
    return f


def _pick_tn(I_pad128, tm, tk, x_b, w_b, out_b, split_k, budget):
    def fits(t):
        return _footprint_bytes(tm, t, tk, x_b, w_b, out_b, split_k) <= budget
    # Prefer the weight-resident tiling (tn = I) so W is DMA'd from HBM exactly once;
    # otherwise the largest multiple of 128 dividing I (no N padding) that still fits.
    for t in range(I_pad128, 127, -128):
        if I_pad128 % t == 0 and fits(t):
            return t
    t = I_pad128
    while t > 128 and not fits(t):
        t -= 128
    return max(t, 128)


# ------------------------------- wrapper ----------------------------------------------


def bert_intermediate_pallas(hidden_states, weight, bias, *,
                             tm=None, tn=None, tk=None,
                             compute_dtype=jnp.bfloat16,
                             out_dtype=None,
                             approximate="none"):
    """GELU(hidden_states @ weight + bias), fused in one Pallas TPU kernel.

    hidden_states: [B, S, H]
    weight:        [H, I]   (transposed from PyTorch nn.Linear's [I, H])
    bias:          [I]
    out_dtype:     default = hidden_states.dtype (torch parity).  Pass bf16 in real
                   pipelines to halve the HBM writeback.
    approximate:   "none" (exact erf, torch default) or "tanh" (EUP-friendly epilogue).
    compute_dtype: MXU input dtype; jnp.float32 reproduces exact torch f32 numerics.
    """
    B, S, H = hidden_states.shape
    H_w, I = weight.shape
    assert H_w == H, "weight must be [H, I] (transposed from torch's [I, H])"
    out_dtype = hidden_states.dtype if out_dtype is None else out_dtype
    act = _gelu_exact_f32 if approximate == "none" else _gelu_tanh_f32
    M = B * S

    x_b = jnp.dtype(hidden_states.dtype).itemsize
    w_b = jnp.dtype(compute_dtype).itemsize
    o_b = jnp.dtype(out_dtype).itemsize

    vmem_limit = _vmem_budget_bytes()
    tile_budget = vmem_limit - 2 * 2 ** 20

    # ---- tile selection ---------------------------------------------------------
    if tk is None:
        tk = H if H <= 4096 else 2048              # real BERT (H=768/1024): one K tile
    split_k = _round_up(H, tk) // tk > 1
    if tm is None:
        tm = _pick_tm(M)
    I_pad128 = _round_up(I, 128)
    if tn is None:
        tn = _pick_tn(I_pad128, tm, tk, x_b, w_b, o_b, split_k, tile_budget)

    M_pad = _round_up(M, tm)
    I_pad = _round_up(I_pad128, tn)
    K_pad = _round_up(H, tk)
    gm, gn, gk = M_pad // tm, I_pad // tn, K_pad // tk
    split_k = gk > 1

    # ---- operands: NO wrapper-side dtype pass over x (cast happens in-kernel) ----
    x2d = hidden_states.reshape(M, H)
    w2d = weight if weight.dtype == compute_dtype else weight.astype(compute_dtype)
    # TODO(synk): in a full model, cache the compute-dtype weight cast across calls.
    b2d = bias.astype(jnp.float32).reshape(1, I)

    if (M_pad, K_pad) != (M, H):                   # only hit for awkward shapes
        x2d = jnp.pad(x2d, ((0, M_pad - M), (0, K_pad - H)))
    if (K_pad, I_pad) != (H, I):
        w2d = jnp.pad(w2d, ((0, K_pad - H), (0, I_pad - I)))
    if I_pad != I:
        b2d = jnp.pad(b2d, ((0, 0), (0, I_pad - I)))

    # ---- cost hint matching the actual DMA pattern -------------------------------
    if not split_k:
        bytes_accessed = (gn * M_pad * K_pad * x_b     # x streams once per W-column slab
                          + K_pad * I_pad * w_b        # W streams from HBM exactly once
                          + M_pad * I_pad * o_b
                          + gn * I_pad * 4)
    else:
        bytes_accessed = (gn * M_pad * K_pad * x_b
                          + gm * K_pad * I_pad * w_b
                          + M_pad * I_pad * o_b
                          + gn * I_pad * 4)
    cost = pl.CostEstimate(
        flops=2 * M_pad * K_pad * I_pad + 10 * M_pad * I_pad,   # matmul + GELU epilogue
        transcendentals=M_pad * I_pad if approximate == "tanh" else 0,  # erf is a VPU poly
        bytes_accessed=int(bytes_accessed),
    )

    out_shape = jax.ShapeDtypeStruct((M_pad, I_pad), out_dtype)

    if not split_k:
        grid_spec = pltpu.PrefetchScalarGridSpec(
            num_scalar_prefetch=0,
            grid=(gn, gm),                          # j outer, i inner: W block invariant
            in_specs=[
                pl.BlockSpec((tm, tk), lambda j, i: (i, 0)),   # x tile (full K)
                pl.BlockSpec((tk, tn), lambda j, i: (0, j)),   # W tile (resident if gn==1)
                pl.BlockSpec((1, tn), lambda j, i: (0, j)),    # bias tile
            ],
            out_specs=pl.BlockSpec((tm, tn), lambda j, i: (i, j)),
        )
        kernel = partial(_ffn_gelu_kernel_2d, compute_dtype=compute_dtype, act=act)
        dim_sem = ("parallel", "parallel")
    else:
        grid_spec = pltpu.PrefetchScalarGridSpec(
            num_scalar_prefetch=0,
            grid=(gn, gm, gk),
            in_specs=[
                pl.BlockSpec((tm, tk), lambda j, i, k: (i, k)),
                pl.BlockSpec((tk, tn), lambda j, i, k: (k, j)),
                pl.BlockSpec((1, tn), lambda j, i, k: (0, j)),
            ],
            out_specs=pl.BlockSpec((tm, tn), lambda j, i, k: (i, j)),
            scratch_shapes=[pltpu.VMEM((tm, tn), jnp.float32)],
        )
        kernel = partial(_ffn_gelu_kernel_3d, compute_dtype=compute_dtype, act=act)
        dim_sem = ("parallel", "parallel", "arbitrary")

    out2d = pl.pallas_call(
        kernel,
        out_shape=out_shape,
        grid_spec=grid_spec,
        compiler_params=pltpu.CompilerParams(
            dimension_semantics=dim_sem,
            vmem_limit_bytes=vmem_limit,
        ),
        cost_estimate=cost,
    )(x2d, w2d, b2d)

    if (M_pad, I_pad) != (M, I):
        out2d = out2d[:M, :I]
    return out2d.reshape(B, S, I)


# ------------------------------- reference & tests -----------------------------------


def _reference(hidden_states, weight, bias, compute_dtype):
    """Plain-JAX reference matching the kernel's compute_dtype / f32-accumulate path."""
    B, S, H = hidden_states.shape
    I = weight.shape[1]
    x = hidden_states.astype(compute_dtype).astype(jnp.float32).reshape(B * S, H)
    w = weight.astype(compute_dtype).astype(jnp.float32)
    z = jnp.dot(x, w, precision=lax.Precision.HIGHEST) + bias.astype(jnp.float32)
    return (0.5 * z * (1.0 + lax.erf(z / math.sqrt(2.0)))).reshape(B, S, I)


if __name__ == "__main__":
    key = jax.random.PRNGKey(0)

    # --- Case 1: small BertConfig-like sizes (H=32, I=128) -> fused 2-D path --------
    B, S, H, I = 2, 8, 32, 128
    kx, kw, kb, key = jax.random.split(key, 4)
    hidden_states = jax.random.normal(kx, (B, S, H), dtype=jnp.float32)
    weight = 0.02 * jax.random.normal(kw, (H, I), dtype=jnp.float32)   # [H, I]
    bias = 0.02 * jax.random.normal(kb, (I,), dtype=jnp.float32)

    out = bert_intermediate_pallas(hidden_states, weight, bias)        # bf16 compute
    jax.block_until_ready(out)
    assert out.shape == (B, S, I)
    ref = _reference(hidden_states, weight, bias, jnp.bfloat16)
    assert jnp.allclose(out, ref, atol=1e-4, rtol=1e-4)

    # f32 compute path reproduces exact torch (f32) numerics.
    out_f32 = bert_intermediate_pallas(hidden_states, weight, bias,
                                       compute_dtype=jnp.float32)
    jax.block_until_ready(out_f32)
    ref_f32 = _reference(hidden_states, weight, bias, jnp.float32)
    assert jnp.allclose(out_f32, ref_f32, atol=1e-5, rtol=1e-5)

    # bf16 output variant (recommended for real pipelines).
    out_bf16 = bert_intermediate_pallas(hidden_states, weight, bias,
                                        out_dtype=jnp.bfloat16)
    jax.block_until_ready(out_bf16)
    assert out_bf16.dtype == jnp.bfloat16
    assert jnp.allclose(out_bf16.astype(jnp.float32), ref, atol=2e-2, rtol=2e-2)

    # EUP-friendly tanh-GELU option compiles and gives sane values.
    out_tanh = bert_intermediate_pallas(hidden_states, weight, bias,
                                        approximate="tanh")
    jax.block_until_ready(out_tanh)
    assert bool(jnp.all(jnp.isfinite(out_tanh)))
    assert jnp.allclose(out_tanh, ref, atol=5e-3, rtol=5e-3)

    # --- Case 2: exercise the split-K accumulator path (forced tk < H) --------------
    B2, S2, H2, I2 = 2, 8, 256, 128
    kx2, kw2, kb2, key = jax.random.split(key, 4)
    hs2 = jax.random.normal(kx2, (B2, S2, H2), dtype=jnp.float32)
    w2 = 0.02 * jax.random.normal(kw2, (H2, I2), dtype=jnp.float32)
    b2 = 0.02 * jax.random.normal(kb2, (I2,), dtype=jnp.float32)

    out2 = bert_intermediate_pallas(hs2, w2, b2, tk=128)               # gk = 2
    jax.block_until_ready(out2)
    assert out2.shape == (B2, S2, I2)
    ref2 = _reference(hs2, w2, b2, jnp.bfloat16)
    assert jnp.allclose(out2, ref2, atol=1e-4, rtol=1e-4)

    print("KERNEL_OK")
</pallas_src>

<mosaic_0001>
module attributes {stable_mosaic.version = 11 : i64} {
  func.func @_ffn_gelu_kernel_2d(%arg0: i32, %arg1: i32, %arg2: memref<16x32xf32, #tpu.memory_space<vmem>>, %arg3: memref<32x128xbf16, #tpu.memory_space<vmem>>, %arg4: memref<1x128xf32, #tpu.memory_space<vmem>>, %arg5: memref<16x128xf32, #tpu.memory_space<vmem>>) attributes {dimension_semantics = [#tpu.dimension_semantics<parallel>, #tpu.dimension_semantics<parallel>], iteration_bounds = array<i64: 1, 1>, scalar_prefetch = 0 : i64, scratch_operands = 0 : i64, tpu.core_type = #tpu.core_type<tc>, window_params = [{transform_indices = @transform_0, window_bounds = array<i64: 16, 32>}, {transform_indices = @transform_1, window_bounds = array<i64: 32, 128>}, {transform_indices = @transform_2, window_bounds = array<i64: 1, 128>}, {transform_indices = @transform_3, window_bounds = array<i64: 16, 128>}]} {
    %c0 = arith.constant 0 : index
    %c0_0 = arith.constant 0 : index
    %0 = vector.load %arg2[%c0, %c0_0] : memref<16x32xf32, #tpu.memory_space<vmem>>, vector<16x32xf32>
    %1 = arith.truncf %0 : vector<16x32xf32> to vector<16x32xbf16>
    %c0_1 = arith.constant 0 : index
    %c0_2 = arith.constant 0 : index
    %2 = vector.load %arg3[%c0_1, %c0_2] : memref<32x128xbf16, #tpu.memory_space<vmem>>, vector<32x128xbf16>
    %cst = arith.constant dense<0.000000e+00> : vector<16x128xf32>
    %3 = tpu.matmul %1, %2, %cst {dimension_numbers = #tpu.dot_dimension_numbers<[1], [0], [0], [1], [0, 0, 1, 1], [], []>} : vector<16x32xbf16>, vector<32x128xbf16>, vector<16x128xf32> -> vector<16x128xf32>
    %c0_3 = arith.constant 0 : index
    %c0_4 = arith.constant 0 : index
    %4 = vector.load %arg4[%c0_3, %c0_4] : memref<1x128xf32, #tpu.memory_space<vmem>>, vector<1x128xf32>
    %5 = vector.broadcast %4 : vector<1x128xf32> to vector<16x128xf32>
    %6 = arith.addf %3, %5 : vector<16x128xf32>
    %cst_5 = arith.constant 5.000000e-01 : f32
    %7 = vector.broadcast %cst_5 : f32 to vector<16x128xf32>
    %8 = arith.mulf %7, %6 : vector<16x128xf32>
    %cst_6 = arith.constant 0.707106769 : f32
    %9 = vector.broadcast %cst_6 : f32 to vector<16x128xf32>
    %10 = arith.mulf %6, %9 : vector<16x128xf32>
    %11 = math.erf %10 : vector<16x128xf32>
    %cst_7 = arith.constant 1.000000e+00 : f32
    %12 = vector.broadcast %cst_7 : f32 to vector<16x128xf32>
    %13 = arith.addf %12, %11 : vector<16x128xf32>
    %14 = arith.mulf %8, %13 : vector<16x128xf32>
    %c0_8 = arith.constant 0 : index
    %c0_9 = arith.constant 0 : index
    %15 = vector.load %arg5[%c0_8, %c0_9] : memref<16x128xf32, #tpu.memory_space<vmem>>, vector<16x128xf32>
    tpu.vector_store %arg5[%c0_8, %c0_9], %14 {strides = array<i32>} : memref<16x128xf32, #tpu.memory_space<vmem>>, vector<16x128xf32>,
    return
  }
  func.func @transform_0(%arg0: i32, %arg1: i32) -> (i32, i32) {
    %c0_i32 = arith.constant 0 : i32
    %c0_i32_0 = arith.constant 0 : i32
    return %arg1, %c0_i32 : i32, i32
  }
  func.func @transform_1(%arg0: i32, %arg1: i32) -> (i32, i32) {
    %c0_i32 = arith.constant 0 : i32
    %c0_i32_0 = arith.constant 0 : i32
    return %c0_i32, %arg0 : i32, i32
  }
  func.func @transform_2(%arg0: i32, %arg1: i32) -> (i32, i32) {
    %c0_i32 = arith.constant 0 : i32
    %c0_i32_0 = arith.constant 0 : i32
    return %c0_i32, %arg0 : i32, i32
  }
  func.func @transform_3(%arg0: i32, %arg1: i32) -> (i32, i32) {
    %c0_i32 = arith.constant 0 : i32
    return %arg1, %arg0 : i32, i32
  }
}

</mosaic_0001>

<llo_original>
// kernel: tpu_custom_call.1
$region0: #{tpu_custom_call.1}
  #allocation0 [shape = 'u32[]', space=smem, size = 0x4, offset = 0x4, fixed_abs, tag = 'smem constant byte address 0x4 - core index']
  #allocation1 [shape = 'u32[144,128]{1,0:T(1,128)}', space=vmem, size = 0x12000, scoped, tag = 'internal scratch']
  %s0 = inlined_call_operand.hbm [shape: f32[16,32], index: 0, kind: input, shape index: {}]
  %s1 = inlined_call_operand.hbm [shape: bf16[32,128], index: 1, kind: input, shape index: {}]
  %s2 = inlined_call_operand.vmem [shape: f32[1,128], index: 2, kind: input, shape index: {}]
  %s3 = inlined_call_operand.hbm [shape: f32[16,128], index: 3, kind: output, shape index: {}]
  %s4 = sld [smem:[#allocation0]]
  $region30: #{tpu_custom_call.1} parent=0
    _
  %s6 = ssub.s32 1, %s4
  %s7 = scalar_select 0, %s6, %s4
  $region1: #{tpu_custom_call.1} parent=0
    #allocation2 [shape = 'u8[8192]{0}', space=vmem, size = 0x2000, scoped, tag = 'input window, operand 0, single buffered']
    #allocation3 [shape = 's32[1]{0}', space=sflag, size = 0x4, scoped, tag = 'scoped memory for tpu_custom_call.1']
    #allocation4 [shape = 's32[1]{0}', space=sflag, size = 0x4, scoped, tag = 'scoped memory for tpu_custom_call.1']
    #allocation5 [shape = 'u8[8192]{0}', space=vmem, size = 0x2000, scoped, tag = 'input window, operand 1, single buffered']
    #allocation6 [shape = 's32[1]{0}', space=sflag, size = 0x4, scoped, tag = 'scoped memory for tpu_custom_call.1']
    #allocation7 [shape = 'u8[8192]{0}', space=vmem, size = 0x2000, scoped, tag = 'output window, operand 0, single buffered']
    %8 = vsyncpa [#allocation3], 0
    %9 = vsyncpa [#allocation6], 0
    %10 = vsyncpa [#allocation4], 0
    // Predicated region
    $region2: #{tpu_custom_call.1} parent=1 // pred_check
      _
    $region3: #{tpu_custom_call.1} parent=1 // pred_check_branch
      %12 = sbr.rel (0) target = $region5
    $region4: #{tpu_custom_call.1} parent=1 // pred_region
      %s14 = ssub.s32 256, 256
      %15 = vsyncadd [#allocation3], %s14
      %s16 = sshll.u32 [#allocation2], 4
      %s17 = int_to_ptr.vmem [resolvable:$true] %s16
      %22 = dma.hbm_to_vmem [thread:$0]  %s0, 256, %s17, [#allocation3], 128, 128, 8
    $region5: #{tpu_custom_call.1} parent=1 // pred_fallthru
      _
    // Predicated region
    $region6: #{tpu_custom_call.1} parent=1 // pred_check
      _
    $region7: #{tpu_custom_call.1} parent=1 // pred_check_branch
      %24 = sbr.rel (0) target = $region9
    $region8: #{tpu_custom_call.1} parent=1 // pred_region
      %s26 = ssub.s32 256, 256
      %27 = vsyncadd [#allocation6], %s26
      %s28 = sshll.u32 [#allocation5], 4
      %s29 = int_to_ptr.vmem [resolvable:$true] %s28
      %34 = dma.hbm_to_vmem [thread:$0]  %s1, 256, %s29, [#allocation6], 64, 64, 4
    $region9: #{tpu_custom_call.1} parent=1 // pred_fallthru
      _
    // Predicated region
    $region10: #{tpu_custom_call.1} parent=1 // pred_check
      _
    $region11: #{tpu_custom_call.1} parent=1 // pred_check_branch
      %36 = sbr.rel (0) target = $region13
    $region12: #{tpu_custom_call.1} parent=1 // pred_region
      _
    $region13: #{tpu_custom_call.1} parent=1 // pred_fallthru
      _
    // Predicated region
    $region14: #{tpu_custom_call.1} parent=1 // pred_check
      _
    $region15: #{tpu_custom_call.1} parent=1 // pred_check_branch
      %38 = sbr.rel (0) target = $region17
    $region16: #{tpu_custom_call.1} parent=1 // pred_region
      %39 = dma.done [#allocation3], 256
    $region17: #{tpu_custom_call.1} parent=1 // pred_fallthru
      _
    // Predicated region
    $region18: #{tpu_custom_call.1} parent=1 // pred_check
      _
    $region19: #{tpu_custom_call.1} parent=1 // pred_check_branch
      %41 = sbr.rel (0) target = $region21
    $region20: #{tpu_custom_call.1} parent=1 // pred_region
      %42 = dma.done [#allocation6], 256
    $region21: #{tpu_custom_call.1} parent=1 // pred_fallthru
      _
    %v44 = vld [vmem:[#allocation2] sm:$0xff]
    %v45 = vld [vmem:[#allocation2 + $0x8] sm:$0xff]
    %v46 = vpack.c.bf16 %v45, %v44
    %v47 = vld [vmem:[#allocation5] sm:$0xf]
    %v48 = vld [vmem:[#allocation5 + $0x4] sm:$0xf]
    %v49 = vld [vmem:[#allocation5 + $0x8] sm:$0xf]
    %v50 = vld [vmem:[#allocation5 + $0xc] sm:$0xf]
    %v51 = vld [vmem:[%s2] sm:$0x1]
    %v53 = vlaneseq
    %v54 = vshrl.u32 %v53, 7
    %v55 = vsub.s32 0, %v54
    %v56 = vrot.slane %v51, %v55
    %v62 = vunpack.c.l.b16 %v47
    %v63 = vunpack.c.l.b16 %v48
    %v64 = vunpack.c.l.b16 %v49
    %v65 = vunpack.c.l.b16 %v50
    %v66 = vpack.c.b16 %v63, %v62
    %v67 = vpack.c.b16 %v65, %v64
    %vm70 = vcmask 261120
    %v72 = vsel %vm70, %v46, 0
    %74 = vmatprep.subr.bf16.mxu0 0
    %75 = vmatpush1.bf16.msra.mxu0 %v66
    %76 = vmatprep.subr.bf16.mxu0 0
    %77 = vmatpush1.bf16.msra.mxu0 %v67
    %78 = vmatprep.subr.bf16.mxu0 0
    %79 = vmatpush1.bf16.msra.mxu0 0
    %80 = vmatprep.subr.bf16.mxu0 0
    %81 = vmatpush1.bf16.msra.mxu0 0
    %82 = vmatprep.subr.bf16.mxu0 0
    %83 = vmatpush1.bf16.msra.mxu0 0
    %84 = vmatprep.subr.bf16.mxu0 0
    %85 = vmatpush1.bf16.msra.mxu0 0
    %86 = vmatprep.subr.bf16.mxu0 0
    %87 = vmatpush1.bf16.msra.mxu0 0
    %88 = vmatprep.subr.bf16.mxu0 0
    %89 = vmatpush1.bf16.msra.mxu0 0
    %90 = vmatprep.subr.bf16.mxu0 0
    %91 = vmatpush1.bf16.msra.mxu0 0
    %92 = vmatprep.subr.bf16.mxu0 0
    %93 = vmatpush1.bf16.msra.mxu0 0
    %94 = vmatprep.subr.bf16.mxu0 0
    %95 = vmatpush1.bf16.msra.mxu0 0
    %96 = vmatprep.subr.bf16.mxu0 0
    %97 = vmatpush1.bf16.msra.mxu0 0
    %98 = vmatprep.subr.bf16.mxu0 0
    %99 = vmatpush1.bf16.msra.mxu0 0
    %100 = vmatprep.subr.bf16.mxu0 0
    %101 = vmatpush1.bf16.msra.mxu0 0
    %102 = vmatprep.subr.bf16.mxu0 0
    %103 = vmatpush1.bf16.msra.mxu0 0
    %104 = vmatprep.subr.bf16.mxu0 0
    %105 = vmatpush1.bf16.msra.mxu0 0
    %106 = vmatprep.mubr.bf16.mxu0 0
    %107 = vmatmul.mubr.bf16.gmra.mrb[0].mxu0 %v72
    %v108 = vpop.f32.mrb[0].mxu0
    %v109 = vadd.f32 %v56, %v108
    %v110 = vpop.f32.mrb[0].mxu0
    %v111 = vpop.f32.mrb[0].mxu0
    %v112 = vadd.f32 %v56, %v111
    %v113 = vpop.f32.mrb[0].mxu0
    %114 = vdwg.mxu0
    %v115 = vmul.f32 %v109, 0.5
    %v116 = vmul.f32 %v112, 0.5
    %v117 = vmul.f32 %v109, 0.70710677
    %v118 = vmul.f32 %v112, 0.70710677
    %v119 = verf.f32.pop %v117
    %v120 = verf.f32.pop %v118
    %v121 = vadd.f32 %v119, 1.0
    %v122 = vadd.f32 %v120, 1.0
    %v123 = vmul.f32 %v115, %v121
    %v124 = vmul.f32 %v116, %v122
    %125 = vst [vmem:[#allocation7] sm:$0xff] %v123
    %126 = vst [vmem:[#allocation7 + $0x8] sm:$0xff] %v124
    // Predicated region
    $region22: #{tpu_custom_call.1} parent=1 // pred_check
      _
    $region23: #{tpu_custom_call.1} parent=1 // pred_check_branch
      %128 = sbr.rel (0) target = $region25
    $region24: #{tpu_custom_call.1} parent=1 // pred_region
      %s130 = ssub.s32 256, 256
      %131 = vsyncadd [#allocation4], %s130
      %s132 = sshll.u32 [#allocation7], 4
      %s133 = int_to_ptr.vmem [resolvable:$true] %s132
      %138 = dma.vmem_to_hbm [thread:$0]  %s133, 256, %s3, [#allocation4], 128, 128, 8
    $region25: #{tpu_custom_call.1} parent=1 // pred_fallthru
      _
    // Predicated region
    $region26: #{tpu_custom_call.1} parent=1 // pred_check
      _
    $region27: #{tpu_custom_call.1} parent=1 // pred_check_branch
      %140 = sbr.rel (0) target = $region29
    $region28: #{tpu_custom_call.1} parent=1 // pred_region
      %141 = dma.done [#allocation4], 256
    $region29: #{tpu_custom_call.1} parent=1 // pred_fallthru
      _
    %142 = vsyncpa [#allocation3], 1
    %143 = vsyncpa [#allocation6], 1
    %144 = vsyncpa [#allocation4], 1

</llo_original>
